<compile_context>
chip_gen: v7x
topology: tpu7x:2x2x1
jax: 0.10.0
libtpu: 0.0.40
codegen_flags: <defaults>
</compile_context>

<pallas_src>
import jax
import jax.numpy as jnp
from jax.experimental import pallas as pl
from jax.experimental.pallas import tpu as pltpu


def _gnn_kernel(xs_ref, a_ref, w_ref, b_ref, p_ref, out_ref):
    """One program = `bg` graphs, fully fused.

    xs_ref : (bg*N, dim)      node features of bg graphs stacked row-wise
    a_ref  : (1, bg*N, bg*N)  block-diagonal adjacency of those bg graphs
    w_ref  : (L, dim, dim)    Linear weights, already in (in, out) layout
    b_ref  : (L, dim)         Linear biases
    p_ref  : (bg, bg*N)       pooling matrix: 1/N on the block diagonal
    out_ref: (bg, dim)        per-graph mean-pooled features
    """
    n_layers = w_ref.shape[0]
    x = xs_ref[...]                       # (bg*N, dim)  f32
    a = a_ref[0]                          # (bg*N, bg*N) f32
    for i in range(n_layers):             # static unroll (layer is tiny)
        # Fused Linear over all bg graphs: (bg*N, dim) @ (dim, dim).
        lin = jnp.dot(x, w_ref[i], preferred_element_type=jnp.float32)
        hs = jnp.maximum(lin + b_ref[i:i + 1, :], 0.0)      # relu(Linear_i(x))
        # Fused message passing: one block-diagonal matmul for all graphs.
        x = x + jnp.dot(a, hs, preferred_element_type=jnp.float32)
    # Mean pooling as a matmul: one MXU push + one dense (bg, dim) store.
    out_ref[...] = jnp.dot(
        p_ref[...], x, preferred_element_type=jnp.float32).astype(out_ref.dtype)


def gnn_forward_batched(xs, A, weights, biases, layer, num_programs=1):
    """Batched Pallas GNN forward.

    xs:           (B, N, dim) float32 — B independent graphs
    A:            (B, N, N)   float32
    weights:      (L, dim, dim) torch-style Linear weights (out, in), shared
    biases:       (L, dim)
    layer:        number of layers to apply (static, layer <= L)
    num_programs: grid size; use 1 on v5e/v6e (single TensorCore), 2 on v7x.
    Returns:      (B, dim) — row b is the pooled (1, dim) output of graph b.
    """
    B, N, dim = xs.shape
    assert A.shape == (B, N, N)
    layer = int(layer)
    G = max(1, int(num_programs))

    # Graphs per program. When G > 1, round bg up to a multiple of 8 so the
    # (bg, dim) output block and (bg*N, dim) input block stay sublane-aligned;
    # for G == 1 every block equals the full array, so no constraint applies.
    bg = -(-B // G)
    if G > 1:
        bg = -(-bg // 8) * 8
    B_pad = bg * G
    if B_pad != B:                        # pad with zero graphs, slice later
        pad = B_pad - B
        xs = jnp.concatenate([xs, jnp.zeros((pad, N, dim), xs.dtype)], axis=0)
        A = jnp.concatenate([A, jnp.zeros((pad, N, N), A.dtype)], axis=0)

    xs_flat = xs.reshape(B_pad * N, dim).astype(jnp.float32)
    # Block-diagonal adjacency per program: (G, bg*N, bg*N).
    A_bd = jnp.einsum(
        'gknm,kl->gknlm',
        A.reshape(G, bg, N, N).astype(jnp.float32),
        jnp.eye(bg, dtype=jnp.float32)).reshape(G, bg * N, bg * N)
    # Weights to (in, out) so the MXU feed is canonical (M,K)x(K,N).
    w = jnp.swapaxes(weights[:layer], 1, 2).astype(jnp.float32)
    b = biases[:layer].astype(jnp.float32)
    # Pooling matrix: 1/N on the block diagonal, (bg, bg*N).
    P = jnp.kron(jnp.eye(bg, dtype=jnp.float32),
                 jnp.full((1, N), 1.0 / N, dtype=jnp.float32))

    out = pl.pallas_call(
        _gnn_kernel,
        out_shape=jax.ShapeDtypeStruct((B_pad, dim), jnp.float32),
        grid=(G,),
        in_specs=[
            pl.BlockSpec((bg * N, dim), lambda g: (g, 0)),
            pl.BlockSpec((1, bg * N, bg * N), lambda g: (g, 0, 0)),
            pl.BlockSpec((layer, dim, dim), lambda g: (0, 0, 0)),
            pl.BlockSpec((layer, dim), lambda g: (0, 0)),
            pl.BlockSpec((bg, bg * N), lambda g: (0, 0)),
        ],
        out_specs=pl.BlockSpec((bg, dim), lambda g: (g, 0)),
        compiler_params=pltpu.CompilerParams(
            dimension_semantics=("parallel",)),
    )(xs_flat, A_bd, w, b, P)
    return out[:B]


def gnn_forward(xs, A, weights, biases, layer):
    """Single-graph wrapper matching the PyTorch module: returns (1, dim)."""
    return gnn_forward_batched(xs[None], A[None], weights, biases, layer,
                               num_programs=1)


def _reference(xs, A, weights, biases, layer):
    x = xs
    for i in range(layer):
        hs = jnp.maximum(x @ weights[i].T + biases[i], 0.0)
        x = x + A @ hs
    return jnp.mean(x, axis=0, keepdims=True)


if __name__ == "__main__":
    key = jax.random.PRNGKey(0)
    N, dim, layer_gnn, batch = 8, 32, 3, 16

    k_xs, k_a, k_w, k_b = jax.random.split(key, 4)
    xs = jax.random.normal(k_xs, (batch, N, dim), dtype=jnp.float32)
    A = jax.random.normal(k_a, (batch, N, N), dtype=jnp.float32)
    # "Linear(dim, dim)" params per layer, torch layout (out, in).
    weights = jax.random.normal(k_w, (layer_gnn, dim, dim), dtype=jnp.float32) * 0.1
    biases = jax.random.normal(k_b, (layer_gnn, dim), dtype=jnp.float32) * 0.1

    ref_b = jnp.concatenate(
        [_reference(xs[i], A[i], weights, biases, layer_gnn) for i in range(batch)],
        axis=0)

    # One program with all graphs (v5e/v6e: single TensorCore).
    out_1p = jax.block_until_ready(
        gnn_forward_batched(xs, A, weights, biases, layer_gnn, num_programs=1))
    assert out_1p.shape == (batch, dim)
    assert jnp.allclose(out_1p, ref_b, atol=1e-4, rtol=1e-4), "1-program mismatch"

    # Two programs (v7x: one per TensorCore via dimension_semantics=parallel).
    out_2p = jax.block_until_ready(
        gnn_forward_batched(xs, A, weights, biases, layer_gnn, num_programs=2))
    assert jnp.allclose(out_2p, ref_b, atol=1e-4, rtol=1e-4), "2-program mismatch"

    # Odd batch exercises the zero-graph padding path.
    out_odd = jax.block_until_ready(
        gnn_forward_batched(xs[:5], A[:5], weights, biases, layer_gnn,
                            num_programs=2))
    assert out_odd.shape == (5, dim)
    assert jnp.allclose(out_odd, ref_b[:5], atol=1e-4, rtol=1e-4), "odd-batch mismatch"

    # Single-graph path: identical semantics to the PyTorch module.
    out_s = jax.block_until_ready(
        gnn_forward(xs[0], A[0], weights, biases, layer_gnn))
    ref_s = _reference(xs[0], A[0], weights, biases, layer_gnn)
    assert out_s.shape == (1, dim)
    assert jnp.allclose(out_s, ref_s, atol=1e-4, rtol=1e-4), "single mismatch"

    print("KERNEL_OK")
</pallas_src>

<mosaic_0001>
module attributes {stable_mosaic.version = 11 : i64} {
  func.func @_gnn_kernel(%arg0: i32, %arg1: memref<128x32xf32, #tpu.memory_space<vmem>>, %arg2: memref<1x128x128xf32, #tpu.memory_space<vmem>>, %arg3: memref<3x32x32xf32, #tpu.memory_space<vmem>>, %arg4: memref<3x32xf32, #tpu.memory_space<vmem>>, %arg5: memref<16x128xf32, #tpu.memory_space<vmem>>, %arg6: memref<16x32xf32, #tpu.memory_space<vmem>>) attributes {dimension_semantics = [#tpu.dimension_semantics<parallel>], iteration_bounds = array<i64: 1>, scalar_prefetch = 0 : i64, scratch_operands = 0 : i64, tpu.core_type = #tpu.core_type<tc>, window_params = [{transform_indices = @transform_0, window_bounds = array<i64: 128, 32>}, {transform_indices = @transform_1, window_bounds = array<i64: 1, 128, 128>}, {pipeline_mode = #tpu.pipeline_mode<synchronous>, transform_indices = @transform_2, window_bounds = array<i64: 3, 32, 32>}, {pipeline_mode = #tpu.pipeline_mode<synchronous>, transform_indices = @transform_3, window_bounds = array<i64: 3, 32>}, {pipeline_mode = #tpu.pipeline_mode<synchronous>, transform_indices = @transform_4, window_bounds = array<i64: 16, 128>}, {transform_indices = @transform_5, window_bounds = array<i64: 16, 32>}]} {
    %c0 = arith.constant 0 : index
    %c0_0 = arith.constant 0 : index
    %0 = vector.load %arg1[%c0, %c0_0] : memref<128x32xf32, #tpu.memory_space<vmem>>, vector<128x32xf32>
    %c0_1 = arith.constant 0 : index
    %c0_2 = arith.constant 0 : index
    %c0_3 = arith.constant 0 : index
    %1 = vector.load %arg2[%c0_1, %c0_2, %c0_3] : memref<1x128x128xf32, #tpu.memory_space<vmem>>, vector<1x128x128xf32>
    %2 = vector.shape_cast %1 : vector<1x128x128xf32> to vector<128x128xf32>
    %c0_4 = arith.constant 0 : index
    %c0_5 = arith.constant 0 : index
    %c0_6 = arith.constant 0 : index
    %3 = vector.load %arg3[%c0_4, %c0_5, %c0_6] : memref<3x32x32xf32, #tpu.memory_space<vmem>>, vector<1x32x32xf32>
    %4 = vector.shape_cast %3 : vector<1x32x32xf32> to vector<32x32xf32>
    %cst = arith.constant dense<0.000000e+00> : vector<128x32xf32>
    %5 = tpu.matmul %0, %4, %cst {dimension_numbers = #tpu.dot_dimension_numbers<[1], [0], [0], [1], [0, 0, 1, 1], [], []>} : vector<128x32xf32>, vector<32x32xf32>, vector<128x32xf32> -> vector<128x32xf32>
    %c0_7 = arith.constant 0 : index
    %c0_8 = arith.constant 0 : index
    %6 = vector.load %arg4[%c0_7, %c0_8] : memref<3x32xf32, #tpu.memory_space<vmem>>, vector<1x32xf32>
    %7 = vector.broadcast %6 : vector<1x32xf32> to vector<128x32xf32>
    %8 = arith.addf %5, %7 : vector<128x32xf32>
    %cst_9 = arith.constant 0.000000e+00 : f32
    %9 = vector.broadcast %cst_9 : f32 to vector<128x32xf32>
    %10 = arith.maximumf %8, %9 : vector<128x32xf32>
    %cst_10 = arith.constant dense<0.000000e+00> : vector<128x32xf32>
    %11 = tpu.matmul %2, %10, %cst_10 {dimension_numbers = #tpu.dot_dimension_numbers<[1], [0], [0], [1], [0, 0, 1, 1], [], []>} : vector<128x128xf32>, vector<128x32xf32>, vector<128x32xf32> -> vector<128x32xf32>
    %12 = arith.addf %0, %11 : vector<128x32xf32>
    %c1 = arith.constant 1 : index
    %c0_11 = arith.constant 0 : index
    %c0_12 = arith.constant 0 : index
    %13 = vector.load %arg3[%c1, %c0_11, %c0_12] : memref<3x32x32xf32, #tpu.memory_space<vmem>>, vector<1x32x32xf32>
    %14 = vector.shape_cast %13 : vector<1x32x32xf32> to vector<32x32xf32>
    %cst_13 = arith.constant dense<0.000000e+00> : vector<128x32xf32>
    %15 = tpu.matmul %12, %14, %cst_13 {dimension_numbers = #tpu.dot_dimension_numbers<[1], [0], [0], [1], [0, 0, 1, 1], [], []>} : vector<128x32xf32>, vector<32x32xf32>, vector<128x32xf32> -> vector<128x32xf32>
    %c1_14 = arith.constant 1 : index
    %c0_15 = arith.constant 0 : index
    %16 = vector.load %arg4[%c1_14, %c0_15] : memref<3x32xf32, #tpu.memory_space<vmem>>, vector<1x32xf32>
    %17 = vector.broadcast %16 : vector<1x32xf32> to vector<128x32xf32>
    %18 = arith.addf %15, %17 : vector<128x32xf32>
    %cst_16 = arith.constant 0.000000e+00 : f32
    %19 = vector.broadcast %cst_16 : f32 to vector<128x32xf32>
    %20 = arith.maximumf %18, %19 : vector<128x32xf32>
    %cst_17 = arith.constant dense<0.000000e+00> : vector<128x32xf32>
    %21 = tpu.matmul %2, %20, %cst_17 {dimension_numbers = #tpu.dot_dimension_numbers<[1], [0], [0], [1], [0, 0, 1, 1], [], []>} : vector<128x128xf32>, vector<128x32xf32>, vector<128x32xf32> -> vector<128x32xf32>
    %22 = arith.addf %12, %21 : vector<128x32xf32>
    %c2 = arith.constant 2 : index
    %c0_18 = arith.constant 0 : index
    %c0_19 = arith.constant 0 : index
    %23 = vector.load %arg3[%c2, %c0_18, %c0_19] : memref<3x32x32xf32, #tpu.memory_space<vmem>>, vector<1x32x32xf32>
    %24 = vector.shape_cast %23 : vector<1x32x32xf32> to vector<32x32xf32>
    %cst_20 = arith.constant dense<0.000000e+00> : vector<128x32xf32>
    %25 = tpu.matmul %22, %24, %cst_20 {dimension_numbers = #tpu.dot_dimension_numbers<[1], [0], [0], [1], [0, 0, 1, 1], [], []>} : vector<128x32xf32>, vector<32x32xf32>, vector<128x32xf32> -> vector<128x32xf32>
    %c2_21 = arith.constant 2 : index
    %c0_22 = arith.constant 0 : index
    %26 = vector.load %arg4[%c2_21, %c0_22] : memref<3x32xf32, #tpu.memory_space<vmem>>, vector<1x32xf32>
    %27 = vector.broadcast %26 : vector<1x32xf32> to vector<128x32xf32>
    %28 = arith.addf %25, %27 : vector<128x32xf32>
    %cst_23 = arith.constant 0.000000e+00 : f32
    %29 = vector.broadcast %cst_23 : f32 to vector<128x32xf32>
    %30 = arith.maximumf %28, %29 : vector<128x32xf32>
    %cst_24 = arith.constant dense<0.000000e+00> : vector<128x32xf32>
    %31 = tpu.matmul %2, %30, %cst_24 {dimension_numbers = #tpu.dot_dimension_numbers<[1], [0], [0], [1], [0, 0, 1, 1], [], []>} : vector<128x128xf32>, vector<128x32xf32>, vector<128x32xf32> -> vector<128x32xf32>
    %32 = arith.addf %22, %31 : vector<128x32xf32>
    %c0_25 = arith.constant 0 : index
    %c0_26 = arith.constant 0 : index
    %33 = vector.load %arg5[%c0_25, %c0_26] : memref<16x128xf32, #tpu.memory_space<vmem>>, vector<16x128xf32>
    %cst_27 = arith.constant dense<0.000000e+00> : vector<16x32xf32>
    %34 = tpu.matmul %33, %32, %cst_27 {dimension_numbers = #tpu.dot_dimension_numbers<[1], [0], [0], [1], [0, 0, 1, 1], [], []>} : vector<16x128xf32>, vector<128x32xf32>, vector<16x32xf32> -> vector<16x32xf32>
    %c0_28 = arith.constant 0 : index
    %c0_29 = arith.constant 0 : index
    %35 = vector.load %arg6[%c0_28, %c0_29] : memref<16x32xf32, #tpu.memory_space<vmem>>, vector<16x32xf32>
    tpu.vector_store %arg6[%c0_28, %c0_29], %34 {strides = array<i32>} : memref<16x32xf32, #tpu.memory_space<vmem>>, vector<16x32xf32>,
    return
  }
  func.func @transform_0(%arg0: i32) -> (i32, i32) {
    %c0_i32 = arith.constant 0 : i32
    %c0_i32_0 = arith.constant 0 : i32
    return %arg0, %c0_i32 : i32, i32
  }
  func.func @transform_1(%arg0: i32) -> (i32, i32, i32) {
    %c0_i32 = arith.constant 0 : i32
    %c0_i32_0 = arith.constant 0 : i32
    %c0_i32_1 = arith.constant 0 : i32
    return %arg0, %c0_i32, %c0_i32_0 : i32, i32, i32
  }
  func.func @transform_2(%arg0: i32) -> (i32, i32, i32) {
    %c0_i32 = arith.constant 0 : i32
    %c0_i32_0 = arith.constant 0 : i32
    %c0_i32_1 = arith.constant 0 : i32
    %c0_i32_2 = arith.constant 0 : i32
    return %c0_i32, %c0_i32_0, %c0_i32_1 : i32, i32, i32
  }
  func.func @transform_3(%arg0: i32) -> (i32, i32) {
    %c0_i32 = arith.constant 0 : i32
    %c0_i32_0 = arith.constant 0 : i32
    %c0_i32_1 = arith.constant 0 : i32
    return %c0_i32, %c0_i32_0 : i32, i32
  }
  func.func @transform_4(%arg0: i32) -> (i32, i32) {
    %c0_i32 = arith.constant 0 : i32
    %c0_i32_0 = arith.constant 0 : i32
    %c0_i32_1 = arith.constant 0 : i32
    return %c0_i32, %c0_i32_0 : i32, i32
  }
  func.func @transform_5(%arg0: i32) -> (i32, i32) {
    %c0_i32 = arith.constant 0 : i32
    %c0_i32_0 = arith.constant 0 : i32
    return %arg0, %c0_i32 : i32, i32
  }
}

</mosaic_0001>

<llo_original>
// kernel: tpu_custom_call.1
$region0: #{tpu_custom_call.1}
  #allocation0 [shape = 'u32[]', space=smem, size = 0x4, offset = 0x4, fixed_abs, tag = 'smem constant byte address 0x4 - core index']
  #allocation1 [shape = 'u32[144,128]{1,0:T(1,128)}', space=vmem, size = 0x12000, scoped, tag = 'internal scratch']
  %s0 = inlined_call_operand.vmem [shape: f32[128,32], index: 0, kind: input, shape index: {}]
  %s1 = inlined_call_operand.vmem [shape: f32[1,128,128], index: 1, kind: input, shape index: {}]
  %s2 = inlined_call_operand.hbm [shape: f32[3,32,32], index: 2, kind: input, shape index: {}]
  %s3 = inlined_call_operand.vmem [shape: f32[3,32], index: 3, kind: input, shape index: {}]
  %s4 = inlined_call_operand.vmem [shape: f32[16,128], index: 4, kind: input, shape index: {}]
  %s5 = inlined_call_operand.hbm [shape: f32[16,32], index: 5, kind: output, shape index: {}]
  %s6 = sld [smem:[#allocation0]]
  $region34: #{tpu_custom_call.1} parent=0
    _
  %s8 = ssub.s32 1, %s6
  %s9 = scalar_select 0, %s8, %s6
  $region1: #{tpu_custom_call.1} parent=0
    #allocation2 [shape = 'u8[49152]{0}', space=vmem, size = 0xc000, scoped, tag = 'input window, operand 2, single buffered']
    #allocation3 [shape = 's32[1]{0}', space=sflag, size = 0x4, scoped, tag = 'scoped memory for tpu_custom_call.1']
    #allocation4 [shape = 's32[1]{0}', space=sflag, size = 0x4, scoped, tag = 'scoped memory for tpu_custom_call.1']
    #allocation5 [shape = 'u8[8192]{0}', space=vmem, size = 0x2000, scoped, tag = 'output window, operand 0, single buffered']
    %10 = vsyncpa [#allocation3], 0
    %11 = vsyncpa [#allocation4], 0
    // Predicated region
    $region2: #{tpu_custom_call.1} parent=1 // pred_check
      _
    $region3: #{tpu_custom_call.1} parent=1 // pred_check_branch
      %13 = sbr.rel (0) target = $region5
    $region4: #{tpu_custom_call.1} parent=1 // pred_region
      _
    $region5: #{tpu_custom_call.1} parent=1 // pred_fallthru
      _
    // Predicated region
    $region6: #{tpu_custom_call.1} parent=1 // pred_check
      _
    $region7: #{tpu_custom_call.1} parent=1 // pred_check_branch
      %15 = sbr.rel (0) target = $region9
    $region8: #{tpu_custom_call.1} parent=1 // pred_region
      _
    $region9: #{tpu_custom_call.1} parent=1 // pred_fallthru
      _
    // Predicated region
    $region10: #{tpu_custom_call.1} parent=1 // pred_check
      _
    $region11: #{tpu_custom_call.1} parent=1 // pred_check_branch
      %17 = sbr.rel (0) target = $region13
    $region12: #{tpu_custom_call.1} parent=1 // pred_region
      %s19 = ssub.s32 1536, 1536
      %20 = vsyncadd [#allocation3], %s19
      %s21 = sshll.u32 [#allocation2], 4
      %s22 = int_to_ptr.vmem [resolvable:$true] %s21
      %27 = dma.hbm_to_vmem [thread:$0]  %s2, 1536, %s22, [#allocation3], 128, 128, 8
    $region13: #{tpu_custom_call.1} parent=1 // pred_fallthru
      _
    // Predicated region
    $region14: #{tpu_custom_call.1} parent=1 // pred_check
      _
    $region15: #{tpu_custom_call.1} parent=1 // pred_check_branch
      %29 = sbr.rel (0) target = $region17
    $region16: #{tpu_custom_call.1} parent=1 // pred_region
      _
    $region17: #{tpu_custom_call.1} parent=1 // pred_fallthru
      _
    // Predicated region
    $region18: #{tpu_custom_call.1} parent=1 // pred_check
      _
    $region19: #{tpu_custom_call.1} parent=1 // pred_check_branch
      %31 = sbr.rel (0) target = $region21
    $region20: #{tpu_custom_call.1} parent=1 // pred_region
      _
    $region21: #{tpu_custom_call.1} parent=1 // pred_fallthru
      _
    // Predicated region
    $region22: #{tpu_custom_call.1} parent=1 // pred_check
      _
    $region23: #{tpu_custom_call.1} parent=1 // pred_check_branch
      %33 = sbr.rel (0) target = $region25
    $region24: #{tpu_custom_call.1} parent=1 // pred_region
      %34 = dma.done [#allocation3], 1536
    $region25: #{tpu_custom_call.1} parent=1 // pred_fallthru
      _
    %v35 = vld [vmem:[%s0] sm:$0xff]
    %v36 = vld [vmem:[%s0 + $0x8] sm:$0xff]
    %v37 = vld [vmem:[%s0 + $0x10] sm:$0xff]
    %v38 = vld [vmem:[%s0 + $0x18] sm:$0xff]
    %v39 = vld [vmem:[%s0 + $0x20] sm:$0xff]
    %v40 = vld [vmem:[%s0 + $0x28] sm:$0xff]
    %v41 = vld [vmem:[%s0 + $0x30] sm:$0xff]
    %v42 = vld [vmem:[%s0 + $0x38] sm:$0xff]
    %v43 = vld [vmem:[%s0 + $0x40] sm:$0xff]
    %v44 = vld [vmem:[%s0 + $0x48] sm:$0xff]
    %v45 = vld [vmem:[%s0 + $0x50] sm:$0xff]
    %v46 = vld [vmem:[%s0 + $0x58] sm:$0xff]
    %v47 = vld [vmem:[%s0 + $0x60] sm:$0xff]
    %v48 = vld [vmem:[%s0 + $0x68] sm:$0xff]
    %v49 = vld [vmem:[%s0 + $0x70] sm:$0xff]
    %v50 = vld [vmem:[%s0 + $0x78] sm:$0xff]
    %v51 = vld [vmem:[%s1] sm:$0xff]
    %v52 = vld [vmem:[%s1 + $0x8] sm:$0xff]
    %v53 = vld [vmem:[%s1 + $0x10] sm:$0xff]
    %v54 = vld [vmem:[%s1 + $0x18] sm:$0xff]
    %v55 = vld [vmem:[%s1 + $0x20] sm:$0xff]
    %v56 = vld [vmem:[%s1 + $0x28] sm:$0xff]
    %v57 = vld [vmem:[%s1 + $0x30] sm:$0xff]
    %v58 = vld [vmem:[%s1 + $0x38] sm:$0xff]
    %v59 = vld [vmem:[%s1 + $0x40] sm:$0xff]
    %v60 = vld [vmem:[%s1 + $0x48] sm:$0xff]
    %v61 = vld [vmem:[%s1 + $0x50] sm:$0xff]
    %v62 = vld [vmem:[%s1 + $0x58] sm:$0xff]
    %v63 = vld [vmem:[%s1 + $0x60] sm:$0xff]
    %v64 = vld [vmem:[%s1 + $0x68] sm:$0xff]
    %v65 = vld [vmem:[%s1 + $0x70] sm:$0xff]
    %v66 = vld [vmem:[%s1 + $0x78] sm:$0xff]
    %v67 = vld [vmem:[#allocation2] sm:$0xff]
    %v68 = vld [vmem:[#allocation2 + $0x8] sm:$0xff]
    %v69 = vld [vmem:[#allocation2 + $0x10] sm:$0xff]
    %v70 = vld [vmem:[#allocation2 + $0x18] sm:$0xff]
    %v71 = vld [vmem:[%s3] sm:$0x1]
    %v72 = vlaneseq
    %v73 = vshrl.u32 %v72, 7
    %v74 = vsub.s32 0, %v73
    %v75 = vrot.slane %v71, %v74
    %vm76 = vcmask 261120
    %v78 = vsel %vm76, %v35, 0
    %v81 = vsel %vm76, %v36, 0
    %v84 = vsel %vm76, %v37, 0
    %v87 = vsel %vm76, %v38, 0
    %v90 = vsel %vm76, %v39, 0
    %v93 = vsel %vm76, %v40, 0
    %v96 = vsel %vm76, %v41, 0
    %v99 = vsel %vm76, %v42, 0
    %v102 = vsel %vm76, %v43, 0
    %v105 = vsel %vm76, %v44, 0
    %v108 = vsel %vm76, %v45, 0
    %v111 = vsel %vm76, %v46, 0
    %v114 = vsel %vm76, %v47, 0
    %v117 = vsel %vm76, %v48, 0
    %v120 = vsel %vm76, %v49, 0
    %v123 = vsel %vm76, %v50, 0
    %125 = vmatprep.subr.mxu0 0.0
    %126 = vmatpush1.msra.mxu0 %v67
    %127 = vmatprep.subr.mxu0 0.0
    %128 = vmatpush1.msra.mxu0 %v68
    %129 = vmatprep.subr.mxu0 0.0
    %130 = vmatpush1.msra.mxu0 %v69
    %131 = vmatprep.subr.mxu0 0.0
    %132 = vmatpush1.msra.mxu0 %v70
    %133 = vmatprep.subr.mxu0 0.0
    %134 = vmatpush1.msra.mxu0 0.0
    %135 = vmatprep.subr.mxu0 0.0
    %136 = vmatpush1.msra.mxu0 0.0
    %137 = vmatprep.subr.mxu0 0.0
    %138 = vmatpush1.msra.mxu0 0.0
    %139 = vmatprep.subr.mxu0 0.0
    %140 = vmatpush1.msra.mxu0 0.0
    %141 = vmatprep.subr.mxu0 0.0
    %142 = vmatpush1.msra.mxu0 0.0
    %143 = vmatprep.subr.mxu0 0.0
    %144 = vmatpush1.msra.mxu0 0.0
    %145 = vmatprep.subr.mxu0 0.0
    %146 = vmatpush1.msra.mxu0 0.0
    %147 = vmatprep.subr.mxu0 0.0
    %148 = vmatpush1.msra.mxu0 0.0
    %149 = vmatprep.subr.mxu0 0.0
    %150 = vmatpush1.msra.mxu0 0.0
    %151 = vmatprep.subr.mxu0 0.0
    %152 = vmatpush1.msra.mxu0 0.0
    %153 = vmatprep.subr.mxu0 0.0
    %154 = vmatpush1.msra.mxu0 0.0
    %155 = vmatprep.subr.mxu0 0.0
    %156 = vmatpush1.msra.mxu0 0.0
    %157 = vmatprep.subr.mxu0 0.0
    %158 = vmatpush1.msra.mxu0 0.0
    %159 = vmatprep.subr.mxu0 0.0
    %160 = vmatpush1.msra.mxu0 0.0
    %161 = vmatprep.subr.mxu0 0.0
    %162 = vmatpush1.msra.mxu0 0.0
    %163 = vmatprep.subr.mxu0 0.0
    %164 = vmatpush1.msra.mxu0 0.0
    %165 = vmatprep.subr.mxu0 0.0
    %166 = vmatpush1.msra.mxu0 0.0
    %167 = vmatprep.subr.mxu0 0.0
    %168 = vmatpush1.msra.mxu0 0.0
    %169 = vmatprep.subr.mxu0 0.0
    %170 = vmatpush1.msra.mxu0 0.0
    %171 = vmatprep.subr.mxu0 0.0
    %172 = vmatpush1.msra.mxu0 0.0
    %173 = vmatprep.subr.mxu0 0.0
    %174 = vmatpush1.msra.mxu0 0.0
    %175 = vmatprep.subr.mxu0 0.0
    %176 = vmatpush1.msra.mxu0 0.0
    %177 = vmatprep.subr.mxu0 0.0
    %178 = vmatpush1.msra.mxu0 0.0
    %179 = vmatprep.subr.mxu0 0.0
    %180 = vmatpush1.msra.mxu0 0.0
    %181 = vmatprep.subr.mxu0 0.0
    %182 = vmatpush1.msra.mxu0 0.0
    %183 = vmatprep.subr.mxu0 0.0
    %184 = vmatpush1.msra.mxu0 0.0
    %185 = vmatprep.subr.mxu0 0.0
    %186 = vmatpush1.msra.mxu0 0.0
    %187 = vmatprep.subr.mxu0 0.0
    %188 = vmatpush1.msra.mxu0 0.0
    %189 = vmatprep.mubr.f32.mxu0 0.0
    %190 = vmatmul.mubr.f32.gmra.mrb[0].mxu0 %v78
    %v191 = vpop.f32.mrb[0].mxu0
    %v192 = vadd.f32 %v75, %v191
    %v193 = vpop.f32.mrb[0].mxu0
    %194 = vmatprep.mubr.f32.mxu0 0.0
    %195 = vmatmul.mubr.f32.gmra.mrb[0].mxu0 %v81
    %v196 = vpop.f32.mrb[0].mxu0
    %v197 = vadd.f32 %v75, %v196
    %v198 = vpop.f32.mrb[0].mxu0
    %199 = vmatprep.mubr.f32.mxu0 0.0
    %200 = vmatmul.mubr.f32.gmra.mrb[0].mxu0 %v84
    %v201 = vpop.f32.mrb[0].mxu0
    %v202 = vadd.f32 %v75, %v201
    %v203 = vpop.f32.mrb[0].mxu0
    %204 = vmatprep.mubr.f32.mxu0 0.0
    %205 = vmatmul.mubr.f32.gmra.mrb[0].mxu0 %v87
    %v206 = vpop.f32.mrb[0].mxu0
    %v207 = vadd.f32 %v75, %v206
    %v208 = vpop.f32.mrb[0].mxu0
    %209 = vmatprep.mubr.f32.mxu0 0.0
    %210 = vmatmul.mubr.f32.gmra.mrb[0].mxu0 %v90
    %v211 = vpop.f32.mrb[0].mxu0
    %v212 = vadd.f32 %v75, %v211
    %v213 = vpop.f32.mrb[0].mxu0
    %214 = vmatprep.mubr.f32.mxu0 0.0
    %215 = vmatmul.mubr.f32.gmra.mrb[0].mxu0 %v93
    %v216 = vpop.f32.mrb[0].mxu0
    %v217 = vadd.f32 %v75, %v216
    %v218 = vpop.f32.mrb[0].mxu0
    %219 = vmatprep.mubr.f32.mxu0 0.0
    %220 = vmatmul.mubr.f32.gmra.mrb[0].mxu0 %v96
    %v221 = vpop.f32.mrb[0].mxu0
    %v222 = vadd.f32 %v75, %v221
    %v223 = vpop.f32.mrb[0].mxu0
    %224 = vmatprep.mubr.f32.mxu0 0.0
    %225 = vmatmul.mubr.f32.gmra.mrb[0].mxu0 %v99
    %v226 = vpop.f32.mrb[0].mxu0
    %v227 = vadd.f32 %v75, %v226
    %v228 = vpop.f32.mrb[0].mxu0
    %229 = vmatprep.mubr.f32.mxu0 0.0
    %230 = vmatmul.mubr.f32.gmra.mrb[0].mxu0 %v102
    %v231 = vpop.f32.mrb[0].mxu0
    %v232 = vadd.f32 %v75, %v231
    %v233 = vpop.f32.mrb[0].mxu0
    %234 = vmatprep.mubr.f32.mxu0 0.0
    %235 = vmatmul.mubr.f32.gmra.mrb[0].mxu0 %v105
    %v236 = vpop.f32.mrb[0].mxu0
    %v237 = vadd.f32 %v75, %v236
    %v238 = vpop.f32.mrb[0].mxu0
    %239 = vmatprep.mubr.f32.mxu0 0.0
    %240 = vmatmul.mubr.f32.gmra.mrb[0].mxu0 %v108
    %v241 = vpop.f32.mrb[0].mxu0
    %v242 = vadd.f32 %v75, %v241
    %v243 = vpop.f32.mrb[0].mxu0
    %244 = vmatprep.mubr.f32.mxu0 0.0
    %245 = vmatmul.mubr.f32.gmra.mrb[0].mxu0 %v111
    %v246 = vpop.f32.mrb[0].mxu0
    %v247 = vadd.f32 %v75, %v246
    %v248 = vpop.f32.mrb[0].mxu0
    %249 = vmatprep.mubr.f32.mxu0 0.0
    %250 = vmatmul.mubr.f32.gmra.mrb[0].mxu0 %v114
    %v251 = vpop.f32.mrb[0].mxu0
    %v252 = vadd.f32 %v75, %v251
    %v253 = vpop.f32.mrb[0].mxu0
    %254 = vmatprep.mubr.f32.mxu0 0.0
    %255 = vmatmul.mubr.f32.gmra.mrb[0].mxu0 %v117
    %v256 = vpop.f32.mrb[0].mxu0
    %v257 = vadd.f32 %v75, %v256
    %v258 = vpop.f32.mrb[0].mxu0
    %259 = vmatprep.mubr.f32.mxu0 0.0
    %260 = vmatmul.mubr.f32.gmra.mrb[0].mxu0 %v120
    %v261 = vpop.f32.mrb[0].mxu0
    %v262 = vadd.f32 %v75, %v261
    %v263 = vpop.f32.mrb[0].mxu0
    %264 = vmatprep.mubr.f32.mxu0 0.0
    %265 = vmatmul.mubr.f32.gmra.mrb[0].mxu0 %v123
    %v266 = vpop.f32.mrb[0].mxu0
    %v267 = vadd.f32 %v75, %v266
    %v268 = vpop.f32.mrb[0].mxu0
    %269 = vdwg.mxu0
    %v270 = vmax.f32 %v192, 0.0
    %v271 = vmax.f32 %v197, 0.0
    %v272 = vmax.f32 %v202, 0.0
    %v273 = vmax.f32 %v207, 0.0
    %v274 = vmax.f32 %v212, 0.0
    %v275 = vmax.f32 %v217, 0.0
    %v276 = vmax.f32 %v222, 0.0
    %v277 = vmax.f32 %v227, 0.0
    %v278 = vmax.f32 %v232, 0.0
    %v279 = vmax.f32 %v237, 0.0
    %v280 = vmax.f32 %v242, 0.0
    %v281 = vmax.f32 %v247, 0.0
    %v282 = vmax.f32 %v252, 0.0
    %v283 = vmax.f32 %v257, 0.0
    %v284 = vmax.f32 %v262, 0.0
    %v285 = vmax.f32 %v267, 0.0
    %286 = vmatprep.subr.mxu0 0.0
    %287 = vmatpush1.msra.mxu0 %v270
    %288 = vmatprep.subr.mxu0 0.0
    %289 = vmatpush1.msra.mxu0 %v271
    %290 = vmatprep.subr.mxu0 0.0
    %291 = vmatpush1.msra.mxu0 %v272
    %292 = vmatprep.subr.mxu0 0.0
    %293 = vmatpush1.msra.mxu0 %v273
    %294 = vmatprep.subr.mxu0 0.0
    %295 = vmatpush1.msra.mxu0 %v274
    %296 = vmatprep.subr.mxu0 0.0
    %297 = vmatpush1.msra.mxu0 %v275
    %298 = vmatprep.subr.mxu0 0.0
    %299 = vmatpush1.msra.mxu0 %v276
    %300 = vmatprep.subr.mxu0 0.0
    %301 = vmatpush1.msra.mxu0 %v277
    %302 = vmatprep.subr.mxu0 0.0
    %303 = vmatpush1.msra.mxu0 %v278
    %304 = vmatprep.subr.mxu0 0.0
    %305 = vmatpush1.msra.mxu0 %v279
    %306 = vmatprep.subr.mxu0 0.0
    %307 = vmatpush1.msra.mxu0 %v280
    %308 = vmatprep.subr.mxu0 0.0
    %309 = vmatpush1.msra.mxu0 %v281
    %310 = vmatprep.subr.mxu0 0.0
    %311 = vmatpush1.msra.mxu0 %v282
    %312 = vmatprep.subr.mxu0 0.0
    %313 = vmatpush1.msra.mxu0 %v283
    %314 = vmatprep.subr.mxu0 0.0
    %315 = vmatpush1.msra.mxu0 %v284
    %316 = vmatprep.subr.mxu0 0.0
    %317 = vmatpush1.msra.mxu0 %v285
    %318 = vmatprep.subr.mxu0 0.0
    %319 = vmatpush1.msra.mxu0 0.0
    %320 = vmatprep.subr.mxu0 0.0
    %321 = vmatpush1.msra.mxu0 0.0
    %322 = vmatprep.subr.mxu0 0.0
    %323 = vmatpush1.msra.mxu0 0.0
    %324 = vmatprep.subr.mxu0 0.0
    %325 = vmatpush1.msra.mxu0 0.0
    %326 = vmatprep.subr.mxu0 0.0
    %327 = vmatpush1.msra.mxu0 0.0
    %328 = vmatprep.subr.mxu0 0.0
    %329 = vmatpush1.msra.mxu0 0.0
    %330 = vmatprep.subr.mxu0 0.0
    %331 = vmatpush1.msra.mxu0 0.0
    %332 = vmatprep.subr.mxu0 0.0
    %333 = vmatpush1.msra.mxu0 0.0
    %334 = vmatprep.subr.mxu0 0.0
    %335 = vmatpush1.msra.mxu0 0.0
    %336 = vmatprep.subr.mxu0 0.0
    %337 = vmatpush1.msra.mxu0 0.0
    %338 = vmatprep.subr.mxu0 0.0
    %339 = vmatpush1.msra.mxu0 0.0
    %340 = vmatprep.subr.mxu0 0.0
    %341 = vmatpush1.msra.mxu0 0.0
    %342 = vmatprep.subr.mxu0 0.0
    %343 = vmatpush1.msra.mxu0 0.0
    %344 = vmatprep.subr.mxu0 0.0
    %345 = vmatpush1.msra.mxu0 0.0
    %346 = vmatprep.subr.mxu0 0.0
    %347 = vmatpush1.msra.mxu0 0.0
    %348 = vmatprep.subr.mxu0 0.0
    %349 = vmatpush1.msra.mxu0 0.0
    %350 = vmatprep.mubr.f32.mxu0 0.0
    %351 = vmatmul.mubr.f32.gmra.mrb[0].mxu0 %v51
    %v352 = vpop.f32.mrb[0].mxu0
    %v353 = vadd.f32 0.0, %v352
    %v354 = vpop.f32.mrb[0].mxu0
    %355 = vmatprep.mubr.f32.mxu0 0.0
    %356 = vmatmul.mubr.f32.gmra.mrb[0].mxu0 %v52
    %v357 = vpop.f32.mrb[0].mxu0
    %v358 = vadd.f32 0.0, %v357
    %v359 = vpop.f32.mrb[0].mxu0
    %360 = vmatprep.mubr.f32.mxu0 0.0
    %361 = vmatmul.mubr.f32.gmra.mrb[0].mxu0 %v53
    %v362 = vpop.f32.mrb[0].mxu0
    %v363 = vadd.f32 0.0, %v362
    %v364 = vpop.f32.mrb[0].mxu0
    %365 = vmatprep.mubr.f32.mxu0 0.0
    %366 = vmatmul.mubr.f32.gmra.mrb[0].mxu0 %v54
    %v367 = vpop.f32.mrb[0].mxu0
    %v368 = vadd.f32 0.0, %v367
    %v369 = vpop.f32.mrb[0].mxu0
    %370 = vmatprep.mubr.f32.mxu0 0.0
    %371 = vmatmul.mubr.f32.gmra.mrb[0].mxu0 %v55
    %v372 = vpop.f32.mrb[0].mxu0
    %v373 = vadd.f32 0.0, %v372
    %v374 = vpop.f32.mrb[0].mxu0
    %375 = vmatprep.mubr.f32.mxu0 0.0
    %376 = vmatmul.mubr.f32.gmra.mrb[0].mxu0 %v56
    %v377 = vpop.f32.mrb[0].mxu0
    %v378 = vadd.f32 0.0, %v377
    %v379 = vpop.f32.mrb[0].mxu0
    %380 = vmatprep.mubr.f32.mxu0 0.0
    %381 = vmatmul.mubr.f32.gmra.mrb[0].mxu0 %v57
    %v382 = vpop.f32.mrb[0].mxu0
    %v383 = vadd.f32 0.0, %v382
    %v384 = vpop.f32.mrb[0].mxu0
    %385 = vmatprep.mubr.f32.mxu0 0.0
    %386 = vmatmul.mubr.f32.gmra.mrb[0].mxu0 %v58
    %v387 = vpop.f32.mrb[0].mxu0
    %v388 = vadd.f32 0.0, %v387
    %v389 = vpop.f32.mrb[0].mxu0
    %390 = vmatprep.mubr.f32.mxu0 0.0
    %391 = vmatmul.mubr.f32.gmra.mrb[0].mxu0 %v59
    %v392 = vpop.f32.mrb[0].mxu0
    %v393 = vadd.f32 0.0, %v392
    %v394 = vpop.f32.mrb[0].mxu0
    %395 = vmatprep.mubr.f32.mxu0 0.0
    %396 = vmatmul.mubr.f32.gmra.mrb[0].mxu0 %v60
    %v397 = vpop.f32.mrb[0].mxu0
    %v398 = vadd.f32 0.0, %v397
    %v399 = vpop.f32.mrb[0].mxu0
    %400 = vmatprep.mubr.f32.mxu0 0.0
    %401 = vmatmul.mubr.f32.gmra.mrb[0].mxu0 %v61
    %v402 = vpop.f32.mrb[0].mxu0
    %v403 = vadd.f32 0.0, %v402
    %v404 = vpop.f32.mrb[0].mxu0
    %405 = vmatprep.mubr.f32.mxu0 0.0
    %406 = vmatmul.mubr.f32.gmra.mrb[0].mxu0 %v62
    %v407 = vpop.f32.mrb[0].mxu0
    %v408 = vadd.f32 0.0, %v407
    %v409 = vpop.f32.mrb[0].mxu0
    %410 = vmatprep.mubr.f32.mxu0 0.0
    %411 = vmatmul.mubr.f32.gmra.mrb[0].mxu0 %v63
    %v412 = vpop.f32.mrb[0].mxu0
    %v413 = vadd.f32 0.0, %v412
    %v414 = vpop.f32.mrb[0].mxu0
    %415 = vmatprep.mubr.f32.mxu0 0.0
    %416 = vmatmul.mubr.f32.gmra.mrb[0].mxu0 %v64
    %v417 = vpop.f32.mrb[0].mxu0
    %v418 = vadd.f32 0.0, %v417
    %v419 = vpop.f32.mrb[0].mxu0
    %420 = vmatprep.mubr.f32.mxu0 0.0
    %421 = vmatmul.mubr.f32.gmra.mrb[0].mxu0 %v65
    %v422 = vpop.f32.mrb[0].mxu0
    %v423 = vadd.f32 0.0, %v422
    %v424 = vpop.f32.mrb[0].mxu0
    %425 = vmatprep.mubr.f32.mxu0 0.0
    %426 = vmatmul.mubr.f32.gmra.mrb[0].mxu0 %v66
    %v427 = vpop.f32.mrb[0].mxu0
    %v428 = vadd.f32 0.0, %v427
    %v429 = vpop.f32.mrb[0].mxu0
    %430 = vdwg.mxu0
    %v431 = vadd.f32 %v35, %v353
    %v432 = vadd.f32 %v36, %v358
    %v433 = vadd.f32 %v37, %v363
    %v434 = vadd.f32 %v38, %v368
    %v435 = vadd.f32 %v39, %v373
    %v436 = vadd.f32 %v40, %v378
    %v437 = vadd.f32 %v41, %v383
    %v438 = vadd.f32 %v42, %v388
    %v439 = vadd.f32 %v43, %v393
    %v440 = vadd.f32 %v44, %v398
    %v441 = vadd.f32 %v45, %v403
    %v442 = vadd.f32 %v46, %v408
    %v443 = vadd.f32 %v47, %v413
    %v444 = vadd.f32 %v48, %v418
    %v445 = vadd.f32 %v49, %v423
    %v446 = vadd.f32 %v50, %v428
    %s447 = scalar_lea.vmem [#allocation2], 32
    %v448 = vld [vmem:[%s447] sm:$0xff]
    %v449 = vld [vmem:[%s447 + $0x8] sm:$0xff]
    %v450 = vld [vmem:[%s447 + $0x10] sm:$0xff]
    %v451 = vld [vmem:[%s447 + $0x18] sm:$0xff]
    %v452 = vld [vmem:[%s3 + $0x1] sm:$0x1]
    %v453 = vlaneseq
    %v454 = vshrl.u32 %v453, 7
    %v455 = vsub.s32 0, %v454
    %v456 = vrot.slane %v452, %v455
    %v458 = vsel %vm76, %v431, 0
    %v461 = vsel %vm76, %v432, 0
    %v464 = vsel %vm76, %v433, 0
    %v467 = vsel %vm76, %v434, 0
    %v470 = vsel %vm76, %v435, 0
    %v473 = vsel %vm76, %v436, 0
    %v476 = vsel %vm76, %v437, 0
    %v479 = vsel %vm76, %v438, 0
    %v482 = vsel %vm76, %v439, 0
    %v485 = vsel %vm76, %v440, 0
    %v488 = vsel %vm76, %v441, 0
    %v491 = vsel %vm76, %v442, 0
    %v494 = vsel %vm76, %v443, 0
    %v497 = vsel %vm76, %v444, 0
    %v500 = vsel %vm76, %v445, 0
    %v503 = vsel %vm76, %v446, 0
    %505 = vmatprep.subr.mxu0 0.0
    %506 = vmatpush1.msra.mxu0 %v448
    %507 = vmatprep.subr.mxu0 0.0
    %508 = vmatpush1.msra.mxu0 %v449
    %509 = vmatprep.subr.mxu0 0.0
    %510 = vmatpush1.msra.mxu0 %v450
    %511 = vmatprep.subr.mxu0 0.0
    %512 = vmatpush1.msra.mxu0 %v451
    %513 = vmatprep.subr.mxu0 0.0
    %514 = vmatpush1.msra.mxu0 0.0
    %515 = vmatprep.subr.mxu0 0.0
    %516 = vmatpush1.msra.mxu0 0.0
    %517 = vmatprep.subr.mxu0 0.0
    %518 = vmatpush1.msra.mxu0 0.0
    %519 = vmatprep.subr.mxu0 0.0
    %520 = vmatpush1.msra.mxu0 0.0
    %521 = vmatprep.subr.mxu0 0.0
    %522 = vmatpush1.msra.mxu0 0.0
    %523 = vmatprep.subr.mxu0 0.0
    %524 = vmatpush1.msra.mxu0 0.0
    %525 = vmatprep.subr.mxu0 0.0
    %526 = vmatpush1.msra.mxu0 0.0
    %527 = vmatprep.subr.mxu0 0.0
    %528 = vmatpush1.msra.mxu0 0.0
    %529 = vmatprep.subr.mxu0 0.0
    %530 = vmatpush1.msra.mxu0 0.0
    %531 = vmatprep.subr.mxu0 0.0
    %532 = vmatpush1.msra.mxu0 0.0
    %533 = vmatprep.subr.mxu0 0.0
    %534 = vmatpush1.msra.mxu0 0.0
    %535 = vmatprep.subr.mxu0 0.0
    %536 = vmatpush1.msra.mxu0 0.0
    %537 = vmatprep.subr.mxu0 0.0
    %538 = vmatpush1.msra.mxu0 0.0
    %539 = vmatprep.subr.mxu0 0.0
    %540 = vmatpush1.msra.mxu0 0.0
    %541 = vmatprep.subr.mxu0 0.0
    %542 = vmatpush1.msra.mxu0 0.0
    %543 = vmatprep.subr.mxu0 0.0
    %544 = vmatpush1.msra.mxu0 0.0
    %545 = vmatprep.subr.mxu0 0.0
    %546 = vmatpush1.msra.mxu0 0.0
    %547 = vmatprep.subr.mxu0 0.0
    %548 = vmatpush1.msra.mxu0 0.0
    %549 = vmatprep.subr.mxu0 0.0
    %550 = vmatpush1.msra.mxu0 0.0
    %551 = vmatprep.subr.mxu0 0.0
    %552 = vmatpush1.msra.mxu0 0.0
    %553 = vmatprep.subr.mxu0 0.0
    %554 = vmatpush1.msra.mxu0 0.0
    %555 = vmatprep.subr.mxu0 0.0
    %556 = vmatpush1.msra.mxu0 0.0
    %557 = vmatprep.subr.mxu0 0.0
    %558 = vmatpush1.msra.mxu0 0.0
    %559 = vmatprep.subr.mxu0 0.0
    %560 = vmatpush1.msra.mxu0 0.0
    %561 = vmatprep.subr.mxu0 0.0
    %562 = vmatpush1.msra.mxu0 0.0
    %563 = vmatprep.subr.mxu0 0.0
    %564 = vmatpush1.msra.mxu0 0.0
    %565 = vmatprep.subr.mxu0 0.0
    %566 = vmatpush1.msra.mxu0 0.0
    %567 = vmatprep.subr.mxu0 0.0
    %568 = vmatpush1.msra.mxu0 0.0
    %569 = vmatprep.mubr.f32.mxu0 0.0
    %570 = vmatmul.mubr.f32.gmra.mrb[0].mxu0 %v458
    %v571 = vpop.f32.mrb[0].mxu0
    %v572 = vadd.f32 %v456, %v571
    %v573 = vpop.f32.mrb[0].mxu0
    %574 = vmatprep.mubr.f32.mxu0 0.0
    %575 = vmatmul.mubr.f32.gmra.mrb[0].mxu0 %v461
    %v576 = vpop.f32.mrb[0].mxu0
    %v577 = vadd.f32 %v456, %v576
    %v578 = vpop.f32.mrb[0].mxu0
    %579 = vmatprep.mubr.f32.mxu0 0.0
    %580 = vmatmul.mubr.f32.gmra.mrb[0].mxu0 %v464
    %v581 = vpop.f32.mrb[0].mxu0
    %v582 = vadd.f32 %v456, %v581
    %v583 = vpop.f32.mrb[0].mxu0
    %584 = vmatprep.mubr.f32.mxu0 0.0
    %585 = vmatmul.mubr.f32.gmra.mrb[0].mxu0 %v467
    %v586 = vpop.f32.mrb[0].mxu0
    %v587 = vadd.f32 %v456, %v586
    %v588 = vpop.f32.mrb[0].mxu0
    %589 = vmatprep.mubr.f32.mxu0 0.0
    %590 = vmatmul.mubr.f32.gmra.mrb[0].mxu0 %v470
    %v591 = vpop.f32.mrb[0].mxu0
    %v592 = vadd.f32 %v456, %v591
    %v593 = vpop.f32.mrb[0].mxu0
    %594 = vmatprep.mubr.f32.mxu0 0.0
    %595 = vmatmul.mubr.f32.gmra.mrb[0].mxu0 %v473
    %v596 = vpop.f32.mrb[0].mxu0
    %v597 = vadd.f32 %v456, %v596
    %v598 = vpop.f32.mrb[0].mxu0
    %599 = vmatprep.mubr.f32.mxu0 0.0
    %600 = vmatmul.mubr.f32.gmra.mrb[0].mxu0 %v476
    %v601 = vpop.f32.mrb[0].mxu0
    %v602 = vadd.f32 %v456, %v601
    %v603 = vpop.f32.mrb[0].mxu0
    %604 = vmatprep.mubr.f32.mxu0 0.0
    %605 = vmatmul.mubr.f32.gmra.mrb[0].mxu0 %v479
    %v606 = vpop.f32.mrb[0].mxu0
    %v607 = vadd.f32 %v456, %v606
    %v608 = vpop.f32.mrb[0].mxu0
    %609 = vmatprep.mubr.f32.mxu0 0.0
    %610 = vmatmul.mubr.f32.gmra.mrb[0].mxu0 %v482
    %v611 = vpop.f32.mrb[0].mxu0
    %v612 = vadd.f32 %v456, %v611
    %v613 = vpop.f32.mrb[0].mxu0
    %614 = vmatprep.mubr.f32.mxu0 0.0
    %615 = vmatmul.mubr.f32.gmra.mrb[0].mxu0 %v485
    %v616 = vpop.f32.mrb[0].mxu0
    %v617 = vadd.f32 %v456, %v616
    %v618 = vpop.f32.mrb[0].mxu0
    %619 = vmatprep.mubr.f32.mxu0 0.0
    %620 = vmatmul.mubr.f32.gmra.mrb[0].mxu0 %v488
    %v621 = vpop.f32.mrb[0].mxu0
    %v622 = vadd.f32 %v456, %v621
    %v623 = vpop.f32.mrb[0].mxu0
    %624 = vmatprep.mubr.f32.mxu0 0.0
    %625 = vmatmul.mubr.f32.gmra.mrb[0].mxu0 %v491
    %v626 = vpop.f32.mrb[0].mxu0
    %v627 = vadd.f32 %v456, %v626
    %v628 = vpop.f32.mrb[0].mxu0
    %629 = vmatprep.mubr.f32.mxu0 0.0
    %630 = vmatmul.mubr.f32.gmra.mrb[0].mxu0 %v494
    %v631 = vpop.f32.mrb[0].mxu0
    %v632 = vadd.f32 %v456, %v631
    %v633 = vpop.f32.mrb[0].mxu0
    %634 = vmatprep.mubr.f32.mxu0 0.0
    %635 = vmatmul.mubr.f32.gmra.mrb[0].mxu0 %v497
    %v636 = vpop.f32.mrb[0].mxu0
    %v637 = vadd.f32 %v456, %v636
    %v638 = vpop.f32.mrb[0].mxu0
    %639 = vmatprep.mubr.f32.mxu0 0.0
    %640 = vmatmul.mubr.f32.gmra.mrb[0].mxu0 %v500
    %v641 = vpop.f32.mrb[0].mxu0
    %v642 = vadd.f32 %v456, %v641
    %v643 = vpop.f32.mrb[0].mxu0
    %644 = vmatprep.mubr.f32.mxu0 0.0
    %645 = vmatmul.mubr.f32.gmra.mrb[0].mxu0 %v503
    %v646 = vpop.f32.mrb[0].mxu0
    %v647 = vadd.f32 %v456, %v646
    %v648 = vpop.f32.mrb[0].mxu0
    %649 = vdwg.mxu0
    %v650 = vmax.f32 %v572, 0.0
    %v651 = vmax.f32 %v577, 0.0
    %v652 = vmax.f32 %v582, 0.0
    %v653 = vmax.f32 %v587, 0.0
    %v654 = vmax.f32 %v592, 0.0
    %v655 = vmax.f32 %v597, 0.0
    %v656 = vmax.f32 %v602, 0.0
    %v657 = vmax.f32 %v607, 0.0
    %v658 = vmax.f32 %v612, 0.0
    %v659 = vmax.f32 %v617, 0.0
    %v660 = vmax.f32 %v622, 0.0
    %v661 = vmax.f32 %v627, 0.0
    %v662 = vmax.f32 %v632, 0.0
    %v663 = vmax.f32 %v637, 0.0
    %v664 = vmax.f32 %v642, 0.0
    %v665 = vmax.f32 %v647, 0.0
    %666 = vmatprep.subr.mxu0 0.0
    %667 = vmatpush1.msra.mxu0 %v650
    %668 = vmatprep.subr.mxu0 0.0
    %669 = vmatpush1.msra.mxu0 %v651
    %670 = vmatprep.subr.mxu0 0.0
    %671 = vmatpush1.msra.mxu0 %v652
    %672 = vmatprep.subr.mxu0 0.0
    %673 = vmatpush1.msra.mxu0 %v653
    %674 = vmatprep.subr.mxu0 0.0
    %675 = vmatpush1.msra.mxu0 %v654
    %676 = vmatprep.subr.mxu0 0.0
    %677 = vmatpush1.msra.mxu0 %v655
    %678 = vmatprep.subr.mxu0 0.0
    %679 = vmatpush1.msra.mxu0 %v656
    %680 = vmatprep.subr.mxu0 0.0
    %681 = vmatpush1.msra.mxu0 %v657
    %682 = vmatprep.subr.mxu0 0.0
    %683 = vmatpush1.msra.mxu0 %v658
    %684 = vmatprep.subr.mxu0 0.0
    %685 = vmatpush1.msra.mxu0 %v659
    %686 = vmatprep.subr.mxu0 0.0
    %687 = vmatpush1.msra.mxu0 %v660
    %688 = vmatprep.subr.mxu0 0.0
    %689 = vmatpush1.msra.mxu0 %v661
    %690 = vmatprep.subr.mxu0 0.0
    %691 = vmatpush1.msra.mxu0 %v662
    %692 = vmatprep.subr.mxu0 0.0
    %693 = vmatpush1.msra.mxu0 %v663
    %694 = vmatprep.subr.mxu0 0.0
    %695 = vmatpush1.msra.mxu0 %v664
    %696 = vmatprep.subr.mxu0 0.0
    %697 = vmatpush1.msra.mxu0 %v665
    %698 = vmatprep.subr.mxu0 0.0
    %699 = vmatpush1.msra.mxu0 0.0
    %700 = vmatprep.subr.mxu0 0.0
    %701 = vmatpush1.msra.mxu0 0.0
    %702 = vmatprep.subr.mxu0 0.0
    %703 = vmatpush1.msra.mxu0 0.0
    %704 = vmatprep.subr.mxu0 0.0
    %705 = vmatpush1.msra.mxu0 0.0
    %706 = vmatprep.subr.mxu0 0.0
    %707 = vmatpush1.msra.mxu0 0.0
    %708 = vmatprep.subr.mxu0 0.0
    %709 = vmatpush1.msra.mxu0 0.0
    %710 = vmatprep.subr.mxu0 0.0
    %711 = vmatpush1.msra.mxu0 0.0
    %712 = vmatprep.subr.mxu0 0.0
    %713 = vmatpush1.msra.mxu0 0.0
    %714 = vmatprep.subr.mxu0 0.0
    %715 = vmatpush1.msra.mxu0 0.0
    %716 = vmatprep.subr.mxu0 0.0
    %717 = vmatpush1.msra.mxu0 0.0
    %718 = vmatprep.subr.mxu0 0.0
    %719 = vmatpush1.msra.mxu0 0.0
    %720 = vmatprep.subr.mxu0 0.0
    %721 = vmatpush1.msra.mxu0 0.0
    %722 = vmatprep.subr.mxu0 0.0
    %723 = vmatpush1.msra.mxu0 0.0
    %724 = vmatprep.subr.mxu0 0.0
    %725 = vmatpush1.msra.mxu0 0.0
    %726 = vmatprep.subr.mxu0 0.0
    %727 = vmatpush1.msra.mxu0 0.0
    %728 = vmatprep.subr.mxu0 0.0
    %729 = vmatpush1.msra.mxu0 0.0
    %730 = vmatprep.mubr.f32.mxu0 0.0
    %731 = vmatmul.mubr.f32.gmra.mrb[0].mxu0 %v51
    %v732 = vpop.f32.mrb[0].mxu0
    %v733 = vadd.f32 0.0, %v732
    %v734 = vpop.f32.mrb[0].mxu0
    %735 = vmatprep.mubr.f32.mxu0 0.0
    %736 = vmatmul.mubr.f32.gmra.mrb[0].mxu0 %v52
    %v737 = vpop.f32.mrb[0].mxu0
    %v738 = vadd.f32 0.0, %v737
    %v739 = vpop.f32.mrb[0].mxu0
    %740 = vmatprep.mubr.f32.mxu0 0.0
    %741 = vmatmul.mubr.f32.gmra.mrb[0].mxu0 %v53
    %v742 = vpop.f32.mrb[0].mxu0
    %v743 = vadd.f32 0.0, %v742
    %v744 = vpop.f32.mrb[0].mxu0
    %745 = vmatprep.mubr.f32.mxu0 0.0
    %746 = vmatmul.mubr.f32.gmra.mrb[0].mxu0 %v54
    %v747 = vpop.f32.mrb[0].mxu0
    %v748 = vadd.f32 0.0, %v747
    %v749 = vpop.f32.mrb[0].mxu0
    %750 = vmatprep.mubr.f32.mxu0 0.0
    %751 = vmatmul.mubr.f32.gmra.mrb[0].mxu0 %v55
    %v752 = vpop.f32.mrb[0].mxu0
    %v753 = vadd.f32 0.0, %v752
    %v754 = vpop.f32.mrb[0].mxu0
    %755 = vmatprep.mubr.f32.mxu0 0.0
    %756 = vmatmul.mubr.f32.gmra.mrb[0].mxu0 %v56
    %v757 = vpop.f32.mrb[0].mxu0
    %v758 = vadd.f32 0.0, %v757
    %v759 = vpop.f32.mrb[0].mxu0
    %760 = vmatprep.mubr.f32.mxu0 0.0
    %761 = vmatmul.mubr.f32.gmra.mrb[0].mxu0 %v57
    %v762 = vpop.f32.mrb[0].mxu0
    %v763 = vadd.f32 0.0, %v762
    %v764 = vpop.f32.mrb[0].mxu0
    %765 = vmatprep.mubr.f32.mxu0 0.0
    %766 = vmatmul.mubr.f32.gmra.mrb[0].mxu0 %v58
    %v767 = vpop.f32.mrb[0].mxu0
    %v768 = vadd.f32 0.0, %v767
    %v769 = vpop.f32.mrb[0].mxu0
    %770 = vmatprep.mubr.f32.mxu0 0.0
    %771 = vmatmul.mubr.f32.gmra.mrb[0].mxu0 %v59
    %v772 = vpop.f32.mrb[0].mxu0
    %v773 = vadd.f32 0.0, %v772
    %v774 = vpop.f32.mrb[0].mxu0
    %775 = vmatprep.mubr.f32.mxu0 0.0
    %776 = vmatmul.mubr.f32.gmra.mrb[0].mxu0 %v60
    %v777 = vpop.f32.mrb[0].mxu0
    %v778 = vadd.f32 0.0, %v777
    %v779 = vpop.f32.mrb[0].mxu0
    %780 = vmatprep.mubr.f32.mxu0 0.0
    %781 = vmatmul.mubr.f32.gmra.mrb[0].mxu0 %v61
    %v782 = vpop.f32.mrb[0].mxu0
    %v783 = vadd.f32 0.0, %v782
    %v784 = vpop.f32.mrb[0].mxu0
    %785 = vmatprep.mubr.f32.mxu0 0.0
    %786 = vmatmul.mubr.f32.gmra.mrb[0].mxu0 %v62
    %v787 = vpop.f32.mrb[0].mxu0
    %v788 = vadd.f32 0.0, %v787
    %v789 = vpop.f32.mrb[0].mxu0
    %790 = vmatprep.mubr.f32.mxu0 0.0
    %791 = vmatmul.mubr.f32.gmra.mrb[0].mxu0 %v63
    %v792 = vpop.f32.mrb[0].mxu0
    %v793 = vadd.f32 0.0, %v792
    %v794 = vpop.f32.mrb[0].mxu0
    %795 = vmatprep.mubr.f32.mxu0 0.0
    %796 = vmatmul.mubr.f32.gmra.mrb[0].mxu0 %v64
    %v797 = vpop.f32.mrb[0].mxu0
    %v798 = vadd.f32 0.0, %v797
    %v799 = vpop.f32.mrb[0].mxu0
    %800 = vmatprep.mubr.f32.mxu0 0.0
    %801 = vmatmul.mubr.f32.gmra.mrb[0].mxu0 %v65
    %v802 = vpop.f32.mrb[0].mxu0
    %v803 = vadd.f32 0.0, %v802
    %v804 = vpop.f32.mrb[0].mxu0
    %805 = vmatprep.mubr.f32.mxu0 0.0
    %806 = vmatmul.mubr.f32.gmra.mrb[0].mxu0 %v66
    %v807 = vpop.f32.mrb[0].mxu0
    %v808 = vadd.f32 0.0, %v807
    %v809 = vpop.f32.mrb[0].mxu0
    %810 = vdwg.mxu0
    %v811 = vadd.f32 %v431, %v733
    %v812 = vadd.f32 %v432, %v738
    %v813 = vadd.f32 %v433, %v743
    %v814 = vadd.f32 %v434, %v748
    %v815 = vadd.f32 %v435, %v753
    %v816 = vadd.f32 %v436, %v758
    %v817 = vadd.f32 %v437, %v763
    %v818 = vadd.f32 %v438, %v768
    %v819 = vadd.f32 %v439, %v773
    %v820 = vadd.f32 %v440, %v778
    %v821 = vadd.f32 %v441, %v783
    %v822 = vadd.f32 %v442, %v788
    %v823 = vadd.f32 %v443, %v793
    %v824 = vadd.f32 %v444, %v798
    %v825 = vadd.f32 %v445, %v803
    %v826 = vadd.f32 %v446, %v808
    %s827 = scalar_lea.vmem [#allocation2], 64
    %v828 = vld [vmem:[%s827] sm:$0xff]
    %v829 = vld [vmem:[%s827 + $0x8] sm:$0xff]
    %v830 = vld [vmem:[%s827 + $0x10] sm:$0xff]
    %v831 = vld [vmem:[%s827 + $0x18] sm:$0xff]
    %v832 = vld [vmem:[%s3 + $0x2] sm:$0x1]
    %v833 = vlaneseq
    %v834 = vshrl.u32 %v833, 7
    %v835 = vsub.s32 0, %v834
    %v836 = vrot.slane %v832, %v835
    %v838 = vsel %vm76, %v811, 0
    %v841 = vsel %vm76, %v812, 0
    %v844 = vsel %vm76, %v813, 0
    %v847 = vsel %vm76, %v814, 0
    %v850 = vsel %vm76, %v815, 0
    %v853 = vsel %vm76, %v816, 0
    %v856 = vsel %vm76, %v817, 0
    %v859 = vsel %vm76, %v818, 0
    %v862 = vsel %vm76, %v819, 0
    %v865 = vsel %vm76, %v820, 0
    %v868 = vsel %vm76, %v821, 0
    %v871 = vsel %vm76, %v822, 0
    %v874 = vsel %vm76, %v823, 0
    %v877 = vsel %vm76, %v824, 0
    %v880 = vsel %vm76, %v825, 0
    %v883 = vsel %vm76, %v826, 0
    %885 = vmatprep.subr.mxu0 0.0
    %886 = vmatpush1.msra.mxu0 %v828
    %887 = vmatprep.subr.mxu0 0.0
    %888 = vmatpush1.msra.mxu0 %v829
    %889 = vmatprep.subr.mxu0 0.0
    %890 = vmatpush1.msra.mxu0 %v830
    %891 = vmatprep.subr.mxu0 0.0
    %892 = vmatpush1.msra.mxu0 %v831
    %893 = vmatprep.subr.mxu0 0.0
    %894 = vmatpush1.msra.mxu0 0.0
    %895 = vmatprep.subr.mxu0 0.0
    %896 = vmatpush1.msra.mxu0 0.0
    %897 = vmatprep.subr.mxu0 0.0
    %898 = vmatpush1.msra.mxu0 0.0
    %899 = vmatprep.subr.mxu0 0.0
    %900 = vmatpush1.msra.mxu0 0.0
    %901 = vmatprep.subr.mxu0 0.0
    %902 = vmatpush1.msra.mxu0 0.0
    %903 = vmatprep.subr.mxu0 0.0
    %904 = vmatpush1.msra.mxu0 0.0
    %905 = vmatprep.subr.mxu0 0.0
    %906 = vmatpush1.msra.mxu0 0.0
    %907 = vmatprep.subr.mxu0 0.0
    %908 = vmatpush1.msra.mxu0 0.0
    %909 = vmatprep.subr.mxu0 0.0
    %910 = vmatpush1.msra.mxu0 0.0
    %911 = vmatprep.subr.mxu0 0.0
    %912 = vmatpush1.msra.mxu0 0.0
    %913 = vmatprep.subr.mxu0 0.0
    %914 = vmatpush1.msra.mxu0 0.0
    %915 = vmatprep.subr.mxu0 0.0
    %916 = vmatpush1.msra.mxu0 0.0
    %917 = vmatprep.subr.mxu0 0.0
    %918 = vmatpush1.msra.mxu0 0.0
    %919 = vmatprep.subr.mxu0 0.0
    %920 = vmatpush1.msra.mxu0 0.0
    %921 = vmatprep.subr.mxu0 0.0
    %922 = vmatpush1.msra.mxu0 0.0
    %923 = vmatprep.subr.mxu0 0.0
    %924 = vmatpush1.msra.mxu0 0.0
    %925 = vmatprep.subr.mxu0 0.0
    %926 = vmatpush1.msra.mxu0 0.0
    %927 = vmatprep.subr.mxu0 0.0
    %928 = vmatpush1.msra.mxu0 0.0
    %929 = vmatprep.subr.mxu0 0.0
    %930 = vmatpush1.msra.mxu0 0.0
    %931 = vmatprep.subr.mxu0 0.0
    %932 = vmatpush1.msra.mxu0 0.0
    %933 = vmatprep.subr.mxu0 0.0
    %934 = vmatpush1.msra.mxu0 0.0
    %935 = vmatprep.subr.mxu0 0.0
    %936 = vmatpush1.msra.mxu0 0.0
    %937 = vmatprep.subr.mxu0 0.0
    %938 = vmatpush1.msra.mxu0 0.0
    %939 = vmatprep.subr.mxu0 0.0
    %940 = vmatpush1.msra.mxu0 0.0
    %941 = vmatprep.subr.mxu0 0.0
    %942 = vmatpush1.msra.mxu0 0.0
    %943 = vmatprep.subr.mxu0 0.0
    %944 = vmatpush1.msra.mxu0 0.0
    %945 = vmatprep.subr.mxu0 0.0
    %946 = vmatpush1.msra.mxu0 0.0
    %947 = vmatprep.subr.mxu0 0.0
    %948 = vmatpush1.msra.mxu0 0.0
    %949 = vmatprep.mubr.f32.mxu0 0.0
    %950 = vmatmul.mubr.f32.gmra.mrb[0].mxu0 %v838
    %v951 = vpop.f32.mrb[0].mxu0
    %v952 = vadd.f32 %v836, %v951
    %v953 = vpop.f32.mrb[0].mxu0
    %954 = vmatprep.mubr.f32.mxu0 0.0
    %955 = vmatmul.mubr.f32.gmra.mrb[0].mxu0 %v841
    %v956 = vpop.f32.mrb[0].mxu0
    %v957 = vadd.f32 %v836, %v956
    %v958 = vpop.f32.mrb[0].mxu0
    %959 = vmatprep.mubr.f32.mxu0 0.0
    %960 = vmatmul.mubr.f32.gmra.mrb[0].mxu0 %v844
    %v961 = vpop.f32.mrb[0].mxu0
    %v962 = vadd.f32 %v836, %v961
    %v963 = vpop.f32.mrb[0].mxu0
    %964 = vmatprep.mubr.f32.mxu0 0.0
    %965 = vmatmul.mubr.f32.gmra.mrb[0].mxu0 %v847
    %v966 = vpop.f32.mrb[0].mxu0
    %v967 = vadd.f32 %v836, %v966
    %v968 = vpop.f32.mrb[0].mxu0
    %969 = vmatprep.mubr.f32.mxu0 0.0
    %970 = vmatmul.mubr.f32.gmra.mrb[0].mxu0 %v850
    %v971 = vpop.f32.mrb[0].mxu0
    %v972 = vadd.f32 %v836, %v971
    %v973 = vpop.f32.mrb[0].mxu0
    %974 = vmatprep.mubr.f32.mxu0 0.0
    %975 = vmatmul.mubr.f32.gmra.mrb[0].mxu0 %v853
    %v976 = vpop.f32.mrb[0].mxu0
    %v977 = vadd.f32 %v836, %v976
    %v978 = vpop.f32.mrb[0].mxu0
    %979 = vmatprep.mubr.f32.mxu0 0.0
    %980 = vmatmul.mubr.f32.gmra.mrb[0].mxu0 %v856
    %v981 = vpop.f32.mrb[0].mxu0
    %v982 = vadd.f32 %v836, %v981
    %v983 = vpop.f32.mrb[0].mxu0
    %984 = vmatprep.mubr.f32.mxu0 0.0
    %985 = vmatmul.mubr.f32.gmra.mrb[0].mxu0 %v859
    %v986 = vpop.f32.mrb[0].mxu0
    %v987 = vadd.f32 %v836, %v986
    %v988 = vpop.f32.mrb[0].mxu0
    %989 = vmatprep.mubr.f32.mxu0 0.0
    %990 = vmatmul.mubr.f32.gmra.mrb[0].mxu0 %v862
    %v991 = vpop.f32.mrb[0].mxu0
    %v992 = vadd.f32 %v836, %v991
    %v993 = vpop.f32.mrb[0].mxu0
    %994 = vmatprep.mubr.f32.mxu0 0.0
    %995 = vmatmul.mubr.f32.gmra.mrb[0].mxu0 %v865
    %v996 = vpop.f32.mrb[0].mxu0
    %v997 = vadd.f32 %v836, %v996
    %v998 = vpop.f32.mrb[0].mxu0
    %999 = vmatprep.mubr.f32.mxu0 0.0
    %1000 = vmatmul.mubr.f32.gmra.mrb[0].mxu0 %v868
    %v1001 = vpop.f32.mrb[0].mxu0
    %v1002 = vadd.f32 %v836, %v1001
    %v1003 = vpop.f32.mrb[0].mxu0
    %1004 = vmatprep.mubr.f32.mxu0 0.0
    %1005 = vmatmul.mubr.f32.gmra.mrb[0].mxu0 %v871
    %v1006 = vpop.f32.mrb[0].mxu0
    %v1007 = vadd.f32 %v836, %v1006
    %v1008 = vpop.f32.mrb[0].mxu0
    %1009 = vmatprep.mubr.f32.mxu0 0.0
    %1010 = vmatmul.mubr.f32.gmra.mrb[0].mxu0 %v874
    %v1011 = vpop.f32.mrb[0].mxu0
    %v1012 = vadd.f32 %v836, %v1011
    %v1013 = vpop.f32.mrb[0].mxu0
    %1014 = vmatprep.mubr.f32.mxu0 0.0
    %1015 = vmatmul.mubr.f32.gmra.mrb[0].mxu0 %v877
    %v1016 = vpop.f32.mrb[0].mxu0
    %v1017 = vadd.f32 %v836, %v1016
    %v1018 = vpop.f32.mrb[0].mxu0
    %1019 = vmatprep.mubr.f32.mxu0 0.0
    %1020 = vmatmul.mubr.f32.gmra.mrb[0].mxu0 %v880
    %v1021 = vpop.f32.mrb[0].mxu0
    %v1022 = vadd.f32 %v836, %v1021
    %v1023 = vpop.f32.mrb[0].mxu0
    %1024 = vmatprep.mubr.f32.mxu0 0.0
    %1025 = vmatmul.mubr.f32.gmra.mrb[0].mxu0 %v883
    %v1026 = vpop.f32.mrb[0].mxu0
    %v1027 = vadd.f32 %v836, %v1026
    %v1028 = vpop.f32.mrb[0].mxu0
    %1029 = vdwg.mxu0
    %v1030 = vmax.f32 %v952, 0.0
    %v1031 = vmax.f32 %v957, 0.0
    %v1032 = vmax.f32 %v962, 0.0
    %v1033 = vmax.f32 %v967, 0.0
    %v1034 = vmax.f32 %v972, 0.0
    %v1035 = vmax.f32 %v977, 0.0
    %v1036 = vmax.f32 %v982, 0.0
    %v1037 = vmax.f32 %v987, 0.0
    %v1038 = vmax.f32 %v992, 0.0
    %v1039 = vmax.f32 %v997, 0.0
    %v1040 = vmax.f32 %v1002, 0.0
    %v1041 = vmax.f32 %v1007, 0.0
    %v1042 = vmax.f32 %v1012, 0.0
    %v1043 = vmax.f32 %v1017, 0.0
    %v1044 = vmax.f32 %v1022, 0.0
    %v1045 = vmax.f32 %v1027, 0.0
    %1046 = vmatprep.subr.mxu0 0.0
    %1047 = vmatpush1.msra.mxu0 %v1030
    %1048 = vmatprep.subr.mxu0 0.0
    %1049 = vmatpush1.msra.mxu0 %v1031
    %1050 = vmatprep.subr.mxu0 0.0
    %1051 = vmatpush1.msra.mxu0 %v1032
    %1052 = vmatprep.subr.mxu0 0.0
    %1053 = vmatpush1.msra.mxu0 %v1033
    %1054 = vmatprep.subr.mxu0 0.0
    %1055 = vmatpush1.msra.mxu0 %v1034
    %1056 = vmatprep.subr.mxu0 0.0
    %1057 = vmatpush1.msra.mxu0 %v1035
    %1058 = vmatprep.subr.mxu0 0.0
    %1059 = vmatpush1.msra.mxu0 %v1036
    %1060 = vmatprep.subr.mxu0 0.0
    %1061 = vmatpush1.msra.mxu0 %v1037
    %1062 = vmatprep.subr.mxu0 0.0
    %1063 = vmatpush1.msra.mxu0 %v1038
    %1064 = vmatprep.subr.mxu0 0.0
    %1065 = vmatpush1.msra.mxu0 %v1039
    %1066 = vmatprep.subr.mxu0 0.0
    %1067 = vmatpush1.msra.mxu0 %v1040
    %1068 = vmatprep.subr.mxu0 0.0
    %1069 = vmatpush1.msra.mxu0 %v1041
    %1070 = vmatprep.subr.mxu0 0.0
    %1071 = vmatpush1.msra.mxu0 %v1042
    %1072 = vmatprep.subr.mxu0 0.0
    %1073 = vmatpush1.msra.mxu0 %v1043
    %1074 = vmatprep.subr.mxu0 0.0
    %1075 = vmatpush1.msra.mxu0 %v1044
    %1076 = vmatprep.subr.mxu0 0.0
    %1077 = vmatpush1.msra.mxu0 %v1045
    %1078 = vmatprep.subr.mxu0 0.0
    %1079 = vmatpush1.msra.mxu0 0.0
    %1080 = vmatprep.subr.mxu0 0.0
    %1081 = vmatpush1.msra.mxu0 0.0
    %1082 = vmatprep.subr.mxu0 0.0
    %1083 = vmatpush1.msra.mxu0 0.0
    %1084 = vmatprep.subr.mxu0 0.0
    %1085 = vmatpush1.msra.mxu0 0.0
    %1086 = vmatprep.subr.mxu0 0.0
    %1087 = vmatpush1.msra.mxu0 0.0
    %1088 = vmatprep.subr.mxu0 0.0
    %1089 = vmatpush1.msra.mxu0 0.0
    %1090 = vmatprep.subr.mxu0 0.0
    %1091 = vmatpush1.msra.mxu0 0.0
    %1092 = vmatprep.subr.mxu0 0.0
    %1093 = vmatpush1.msra.mxu0 0.0
    %1094 = vmatprep.subr.mxu0 0.0
    %1095 = vmatpush1.msra.mxu0 0.0
    %1096 = vmatprep.subr.mxu0 0.0
    %1097 = vmatpush1.msra.mxu0 0.0
    %1098 = vmatprep.subr.mxu0 0.0
    %1099 = vmatpush1.msra.mxu0 0.0
    %1100 = vmatprep.subr.mxu0 0.0
    %1101 = vmatpush1.msra.mxu0 0.0
    %1102 = vmatprep.subr.mxu0 0.0
    %1103 = vmatpush1.msra.mxu0 0.0
    %1104 = vmatprep.subr.mxu0 0.0
    %1105 = vmatpush1.msra.mxu0 0.0
    %1106 = vmatprep.subr.mxu0 0.0
    %1107 = vmatpush1.msra.mxu0 0.0
    %1108 = vmatprep.subr.mxu0 0.0
    %1109 = vmatpush1.msra.mxu0 0.0
    %1110 = vmatprep.mubr.f32.mxu0 0.0
    %1111 = vmatmul.mubr.f32.gmra.mrb[0].mxu0 %v51
    %v1112 = vpop.f32.mrb[0].mxu0
    %v1113 = vadd.f32 0.0, %v1112
    %v1114 = vpop.f32.mrb[0].mxu0
    %1115 = vmatprep.mubr.f32.mxu0 0.0
    %1116 = vmatmul.mubr.f32.gmra.mrb[0].mxu0 %v52
    %v1117 = vpop.f32.mrb[0].mxu0
    %v1118 = vadd.f32 0.0, %v1117
    %v1119 = vpop.f32.mrb[0].mxu0
    %1120 = vmatprep.mubr.f32.mxu0 0.0
    %1121 = vmatmul.mubr.f32.gmra.mrb[0].mxu0 %v53
    %v1122 = vpop.f32.mrb[0].mxu0
    %v1123 = vadd.f32 0.0, %v1122
    %v1124 = vpop.f32.mrb[0].mxu0
    %1125 = vmatprep.mubr.f32.mxu0 0.0
    %1126 = vmatmul.mubr.f32.gmra.mrb[0].mxu0 %v54
    %v1127 = vpop.f32.mrb[0].mxu0
    %v1128 = vadd.f32 0.0, %v1127
    %v1129 = vpop.f32.mrb[0].mxu0
    %1130 = vmatprep.mubr.f32.mxu0 0.0
    %1131 = vmatmul.mubr.f32.gmra.mrb[0].mxu0 %v55
    %v1132 = vpop.f32.mrb[0].mxu0
    %v1133 = vadd.f32 0.0, %v1132
    %v1134 = vpop.f32.mrb[0].mxu0
    %1135 = vmatprep.mubr.f32.mxu0 0.0
    %1136 = vmatmul.mubr.f32.gmra.mrb[0].mxu0 %v56
    %v1137 = vpop.f32.mrb[0].mxu0
    %v1138 = vadd.f32 0.0, %v1137
    %v1139 = vpop.f32.mrb[0].mxu0
    %1140 = vmatprep.mubr.f32.mxu0 0.0
    %1141 = vmatmul.mubr.f32.gmra.mrb[0].mxu0 %v57
    %v1142 = vpop.f32.mrb[0].mxu0
    %v1143 = vadd.f32 0.0, %v1142
    %v1144 = vpop.f32.mrb[0].mxu0
    %1145 = vmatprep.mubr.f32.mxu0 0.0
    %1146 = vmatmul.mubr.f32.gmra.mrb[0].mxu0 %v58
    %v1147 = vpop.f32.mrb[0].mxu0
    %v1148 = vadd.f32 0.0, %v1147
    %v1149 = vpop.f32.mrb[0].mxu0
    %1150 = vmatprep.mubr.f32.mxu0 0.0
    %1151 = vmatmul.mubr.f32.gmra.mrb[0].mxu0 %v59
    %v1152 = vpop.f32.mrb[0].mxu0
    %v1153 = vadd.f32 0.0, %v1152
    %v1154 = vpop.f32.mrb[0].mxu0
    %1155 = vmatprep.mubr.f32.mxu0 0.0
    %1156 = vmatmul.mubr.f32.gmra.mrb[0].mxu0 %v60
    %v1157 = vpop.f32.mrb[0].mxu0
    %v1158 = vadd.f32 0.0, %v1157
    %v1159 = vpop.f32.mrb[0].mxu0
    %1160 = vmatprep.mubr.f32.mxu0 0.0
    %1161 = vmatmul.mubr.f32.gmra.mrb[0].mxu0 %v61
    %v1162 = vpop.f32.mrb[0].mxu0
    %v1163 = vadd.f32 0.0, %v1162
    %v1164 = vpop.f32.mrb[0].mxu0
    %1165 = vmatprep.mubr.f32.mxu0 0.0
    %1166 = vmatmul.mubr.f32.gmra.mrb[0].mxu0 %v62
    %v1167 = vpop.f32.mrb[0].mxu0
    %v1168 = vadd.f32 0.0, %v1167
    %v1169 = vpop.f32.mrb[0].mxu0
    %1170 = vmatprep.mubr.f32.mxu0 0.0
    %1171 = vmatmul.mubr.f32.gmra.mrb[0].mxu0 %v63
    %v1172 = vpop.f32.mrb[0].mxu0
    %v1173 = vadd.f32 0.0, %v1172
    %v1174 = vpop.f32.mrb[0].mxu0
    %1175 = vmatprep.mubr.f32.mxu0 0.0
    %1176 = vmatmul.mubr.f32.gmra.mrb[0].mxu0 %v64
    %v1177 = vpop.f32.mrb[0].mxu0
    %v1178 = vadd.f32 0.0, %v1177
    %v1179 = vpop.f32.mrb[0].mxu0
    %1180 = vmatprep.mubr.f32.mxu0 0.0
    %1181 = vmatmul.mubr.f32.gmra.mrb[0].mxu0 %v65
    %v1182 = vpop.f32.mrb[0].mxu0
    %v1183 = vadd.f32 0.0, %v1182
    %v1184 = vpop.f32.mrb[0].mxu0
    %1185 = vmatprep.mubr.f32.mxu0 0.0
    %1186 = vmatmul.mubr.f32.gmra.mrb[0].mxu0 %v66
    %v1187 = vpop.f32.mrb[0].mxu0
    %v1188 = vadd.f32 0.0, %v1187
    %v1189 = vpop.f32.mrb[0].mxu0
    %1190 = vdwg.mxu0
    %v1191 = vadd.f32 %v811, %v1113
    %v1192 = vadd.f32 %v812, %v1118
    %v1193 = vadd.f32 %v813, %v1123
    %v1194 = vadd.f32 %v814, %v1128
    %v1195 = vadd.f32 %v815, %v1133
    %v1196 = vadd.f32 %v816, %v1138
    %v1197 = vadd.f32 %v817, %v1143
    %v1198 = vadd.f32 %v818, %v1148
    %v1199 = vadd.f32 %v819, %v1153
    %v1200 = vadd.f32 %v820, %v1158
    %v1201 = vadd.f32 %v821, %v1163
    %v1202 = vadd.f32 %v822, %v1168
    %v1203 = vadd.f32 %v823, %v1173
    %v1204 = vadd.f32 %v824, %v1178
    %v1205 = vadd.f32 %v825, %v1183
    %v1206 = vadd.f32 %v826, %v1188
    %v1207 = vld [vmem:[%s4] sm:$0xff]
    %v1208 = vld [vmem:[%s4 + $0x8] sm:$0xff]
    %1209 = vmatprep.subr.mxu0 0.0
    %1210 = vmatpush1.msra.mxu0 %v1191
    %1211 = vmatprep.subr.mxu0 0.0
    %1212 = vmatpush1.msra.mxu0 %v1192
    %1213 = vmatprep.subr.mxu0 0.0
    %1214 = vmatpush1.msra.mxu0 %v1193
    %1215 = vmatprep.subr.mxu0 0.0
    %1216 = vmatpush1.msra.mxu0 %v1194
    %1217 = vmatprep.subr.mxu0 0.0
    %1218 = vmatpush1.msra.mxu0 %v1195
    %1219 = vmatprep.subr.mxu0 0.0
    %1220 = vmatpush1.msra.mxu0 %v1196
    %1221 = vmatprep.subr.mxu0 0.0
    %1222 = vmatpush1.msra.mxu0 %v1197
    %1223 = vmatprep.subr.mxu0 0.0
    %1224 = vmatpush1.msra.mxu0 %v1198
    %1225 = vmatprep.subr.mxu0 0.0
    %1226 = vmatpush1.msra.mxu0 %v1199
    %1227 = vmatprep.subr.mxu0 0.0
    %1228 = vmatpush1.msra.mxu0 %v1200
    %1229 = vmatprep.subr.mxu0 0.0
    %1230 = vmatpush1.msra.mxu0 %v1201
    %1231 = vmatprep.subr.mxu0 0.0
    %1232 = vmatpush1.msra.mxu0 %v1202
    %1233 = vmatprep.subr.mxu0 0.0
    %1234 = vmatpush1.msra.mxu0 %v1203
    %1235 = vmatprep.subr.mxu0 0.0
    %1236 = vmatpush1.msra.mxu0 %v1204
    %1237 = vmatprep.subr.mxu0 0.0
    %1238 = vmatpush1.msra.mxu0 %v1205
    %1239 = vmatprep.subr.mxu0 0.0
    %1240 = vmatpush1.msra.mxu0 %v1206
    %1241 = vmatprep.subr.mxu0 0.0
    %1242 = vmatpush1.msra.mxu0 0.0
    %1243 = vmatprep.subr.mxu0 0.0
    %1244 = vmatpush1.msra.mxu0 0.0
    %1245 = vmatprep.subr.mxu0 0.0
    %1246 = vmatpush1.msra.mxu0 0.0
    %1247 = vmatprep.subr.mxu0 0.0
    %1248 = vmatpush1.msra.mxu0 0.0
    %1249 = vmatprep.subr.mxu0 0.0
    %1250 = vmatpush1.msra.mxu0 0.0
    %1251 = vmatprep.subr.mxu0 0.0
    %1252 = vmatpush1.msra.mxu0 0.0
    %1253 = vmatprep.subr.mxu0 0.0
    %1254 = vmatpush1.msra.mxu0 0.0
    %1255 = vmatprep.subr.mxu0 0.0
    %1256 = vmatpush1.msra.mxu0 0.0
    %1257 = vmatprep.subr.mxu0 0.0
    %1258 = vmatpush1.msra.mxu0 0.0
    %1259 = vmatprep.subr.mxu0 0.0
    %1260 = vmatpush1.msra.mxu0 0.0
    %1261 = vmatprep.subr.mxu0 0.0
    %1262 = vmatpush1.msra.mxu0 0.0
    %1263 = vmatprep.subr.mxu0 0.0
    %1264 = vmatpush1.msra.mxu0 0.0
    %1265 = vmatprep.subr.mxu0 0.0
    %1266 = vmatpush1.msra.mxu0 0.0
    %1267 = vmatprep.subr.mxu0 0.0
    %1268 = vmatpush1.msra.mxu0 0.0
    %1269 = vmatprep.subr.mxu0 0.0
    %1270 = vmatpush1.msra.mxu0 0.0
    %1271 = vmatprep.subr.mxu0 0.0
    %1272 = vmatpush1.msra.mxu0 0.0
    %1273 = vmatprep.mubr.f32.mxu0 0.0
    %1274 = vmatmul.mubr.f32.gmra.mrb[0].mxu0 %v1207
    %v1275 = vpop.f32.mrb[0].mxu0
    %v1276 = vadd.f32 0.0, %v1275
    %v1277 = vpop.f32.mrb[0].mxu0
    %1278 = vmatprep.mubr.f32.mxu0 0.0
    %1279 = vmatmul.mubr.f32.gmra.mrb[0].mxu0 %v1208
    %v1280 = vpop.f32.mrb[0].mxu0
    %v1281 = vadd.f32 0.0, %v1280
    %v1282 = vpop.f32.mrb[0].mxu0
    %1283 = vdwg.mxu0
    %1284 = vst.msk [vmem:[#allocation5] sm:$0xff] %vm76, %v1276
    %1285 = vst.msk [vmem:[#allocation5 + $0x8] sm:$0xff] %vm76, %v1281
    // Predicated region
    $region26: #{tpu_custom_call.1} parent=1 // pred_check
      _
    $region27: #{tpu_custom_call.1} parent=1 // pred_check_branch
      %1287 = sbr.rel (0) target = $region29
    $region28: #{tpu_custom_call.1} parent=1 // pred_region
      %s1289 = ssub.s32 256, 256
      %1290 = vsyncadd [#allocation4], %s1289
      %s1291 = sshll.u32 [#allocation5], 4
      %s1292 = int_to_ptr.vmem [resolvable:$true] %s1291
      %1297 = dma.vmem_to_hbm [thread:$0]  %s1292, 256, %s5, [#allocation4], 128, 128, 8
    $region29: #{tpu_custom_call.1} parent=1 // pred_fallthru
      _
    // Predicated region
    $region30: #{tpu_custom_call.1} parent=1 // pred_check
      _
    $region31: #{tpu_custom_call.1} parent=1 // pred_check_branch
      %1299 = sbr.rel (0) target = $region33
    $region32: #{tpu_custom_call.1} parent=1 // pred_region
      %1300 = dma.done [#allocation4], 256
    $region33: #{tpu_custom_call.1} parent=1 // pred_fallthru
      _
    %1301 = vsyncpa [#allocation3], 1
    %1302 = vsyncpa [#allocation4], 1

</llo_original>
